<compile_context>
chip_gen: v5e
topology: v5e:2x2
jax: 0.10.0
libtpu: 0.0.40
codegen_flags: <defaults>
</compile_context>

<pallas_src>
import functools

import numpy as np

import jax
import jax.numpy as jnp
from jax import lax
from jax.experimental import pallas as pl
from jax.experimental.pallas import tpu as pltpu


# ----------------------------- kernel ---------------------------------------

def convblock_kernel(x_ref, w1_ref, b1_ref, w2_ref, b2_ref, out_ref, *,
                     img_rows):
    # x_ref:  (B*H, W*Cin)   f32   batch tile, channels folded into lanes
    # w1_ref: (3*W*Cin,  W*Cout) bf16  banded conv1 weights (BN1 scale folded)
    # w2_ref: (3*W*Cout, W*Cout) bf16  banded conv2 weights (BN2 scale folded)
    # b*_ref: (1, W*Cout) f32   folded BN bias, tiled across width
    # out_ref:(B*H, W*Cout) f32 lane-dense output slab
    H = img_rows
    bh = x_ref.shape[0]

    def conv3x3(a, w_ref):
        # a: (bh, wci) f32.  3x3 / stride 1 / pad 1 conv as ONE MXU matmul:
        # kx taps + width padding live in the banded weight (host side); ky
        # taps + height padding are folded into the input by lane-concatenating
        # the row-shifted copies [row i-1, row i, row i+1].
        wci = a.shape[1]
        rr = lax.broadcasted_iota(jnp.int32, (bh, wci), 0)
        zrow = jnp.zeros((1, wci), a.dtype)
        a_prev = jnp.concatenate([zrow, a[:bh - 1]], axis=0)   # row i <- a[i-1]
        a_next = jnp.concatenate([a[1:], zrow], axis=0)        # row i <- a[i+1]
        a_prev = jnp.where(rr % H == 0, 0.0, a_prev)       # top pad, per image
        a_next = jnp.where(rr % H == H - 1, 0.0, a_next)   # bottom pad, per img
        a_cat = jnp.concatenate([a_prev, a, a_next], axis=1)   # (bh, 3*wci)
        return jnp.dot(a_cat.astype(w_ref.dtype), w_ref[...],
                       preferred_element_type=jnp.float32)

    x = x_ref[...]
    h = jnp.maximum(conv3x3(x, w1_ref) + b1_ref[...], 0.0)   # conv1 + BN1 + ReLU
    o = jnp.maximum(conv3x3(h, w2_ref) + b2_ref[...], 0.0)   # conv2 + BN2 + ReLU
    out_ref[...] = o.astype(out_ref.dtype)


# ----------------------------- wrapper ---------------------------------------

@jax.jit
def convblock(x_nhwc, w1p, b1t, w2p, b2t):
    """x_nhwc: (N, H, W, Cin) f32.  Returns (N, H, W, Cout) f32."""
    N, H, W, Cin = x_nhwc.shape
    WCi = W * Cin
    WCo = w1p.shape[1]
    Cout = WCo // W

    # Batch tile: stack images so each grid step feeds ~256 MXU rows.  For the
    # demo (N*H = 32) this collapses to grid=(1,): whole batch in one step.
    bt = max(1, min(N, 256 // H if H <= 256 else 1))
    while N % bt:
        bt -= 1
    BH = bt * H
    grid = (N // bt,)

    x2 = x_nhwc.reshape(N * H, WCi)      # free view: lane-folded slab layout

    flops = 2 * N * H * (3 * WCi) * WCo + 2 * N * H * (3 * WCo) * WCo
    bytes_accessed = (x2.size * x2.dtype.itemsize
                      + w1p.size * w1p.dtype.itemsize
                      + w2p.size * w2p.dtype.itemsize
                      + b1t.size * b1t.dtype.itemsize
                      + b2t.size * b2t.dtype.itemsize
                      + N * H * WCo * 4)

    out2 = pl.pallas_call(
        functools.partial(convblock_kernel, img_rows=H),
        out_shape=jax.ShapeDtypeStruct((N * H, WCo), jnp.float32),
        grid=grid,
        in_specs=[
            pl.BlockSpec((BH, WCi), lambda n: (n, 0)),
            pl.BlockSpec(w1p.shape, lambda n: (0, 0)),
            pl.BlockSpec(b1t.shape, lambda n: (0, 0)),
            pl.BlockSpec(w2p.shape, lambda n: (0, 0)),
            pl.BlockSpec(b2t.shape, lambda n: (0, 0)),
        ],
        out_specs=pl.BlockSpec((BH, WCo), lambda n: (n, 0)),
        compiler_params=pltpu.CompilerParams(
            dimension_semantics=("parallel",),        # batch tiles -> v7x TCs
            vmem_limit_bytes=32 * 1024 * 1024),
        cost_estimate=pl.CostEstimate(flops=flops, transcendentals=0,
                                      bytes_accessed=bytes_accessed),
    )(x2, w1p, b1t, w2p, b2t)

    return out2.reshape(N, H, W, Cout)


# ----------------------------- weight packing (host-side glue) ---------------

def pack_conv_banded(w_hwio, W, scale=None, dtype=jnp.bfloat16):
    """(3,3,Ci,Co) HWIO -> (3*W*Ci, W*Co) banded one-matmul conv weights.

    Folds the kernel-width (kx) taps and the width zero-padding into the
    contraction dim; the three ky blocks are stacked along the contraction dim
    in the order [row i-1, row i, row i+1], matching the kernel's lane-concat
    of the row-shifted activations.  Optionally folds a per-output-channel BN
    scale into the columns.  Hard-wired to 3x3 / stride 1 / padding 1.
    """
    w = np.asarray(w_hwio, np.float32)
    kh, kw, Ci, Co = w.shape
    if scale is not None:
        w = w * np.asarray(scale, np.float32)[None, None, None, :]
    jin = np.arange(W)[:, None]
    jout = np.arange(W)[None, :]
    # ind[dx, jin, jout] = 1 iff jin == jout + dx - 1 (taps outside [0, W) are
    # simply absent -> width zero-padding handled for free).
    ind = np.stack([(jin == jout + dx - 1) for dx in range(kw)],
                   axis=0).astype(np.float32)                 # (3, W, W)
    # b[ky, jin, ci, jout, co] = sum_dx ind[dx, jin, jout] * w[ky, dx, ci, co]
    b = np.einsum('dab,ydio->yaibo', ind, w)
    return jnp.asarray(b.reshape(kh * W * Ci, W * Co), dtype)


def tile_bn_bias(v, W):
    """(Co,) per-channel folded BN bias -> (1, W*Co) tiled across width."""
    return jnp.asarray(np.tile(np.asarray(v, np.float32), W).reshape(1, -1),
                       jnp.float32)


# ----------------------------- reference & params ----------------------------

def ref_forward(x_nhwc, w1_hwio, s1, b1, w2_hwio, s2, b2):
    """Pure-JAX reference (NHWC, inference-mode BN), f32 HIGHEST precision."""
    dn = ('NHWC', 'HWIO', 'NHWC')
    conv = functools.partial(lax.conv_general_dilated,
                             window_strides=(1, 1), padding='SAME',
                             dimension_numbers=dn,
                             precision=lax.Precision.HIGHEST)
    h = jnp.maximum(conv(x_nhwc, w1_hwio) * s1 + b1, 0.0)
    return jnp.maximum(conv(h, w2_hwio) * s2 + b2, 0.0)


def make_params(key, in_channels, out_channels):
    """Deterministic synthetic parameters (shapes match the PyTorch module)."""
    ks = jax.random.split(key, 10)
    eps = 1e-5

    w1_hwio = jax.random.normal(ks[0], (3, 3, in_channels, out_channels),
                                jnp.float32) * 0.1
    w2_hwio = jax.random.normal(ks[1], (3, 3, out_channels, out_channels),
                                jnp.float32) * 0.1

    def bn_fold(kg, kb, km, kv, c):
        gamma = 1.0 + 0.1 * jax.random.normal(kg, (c,), jnp.float32)
        beta = 0.1 * jax.random.normal(kb, (c,), jnp.float32)
        mean = 0.1 * jax.random.normal(km, (c,), jnp.float32)
        var = jax.random.uniform(kv, (c,), jnp.float32, 0.5, 1.5)
        scale = gamma / jnp.sqrt(var + eps)
        bias = beta - mean * scale
        return scale, bias

    s1, b1 = bn_fold(ks[2], ks[3], ks[4], ks[5], out_channels)
    s2, b2 = bn_fold(ks[6], ks[7], ks[8], ks[9], out_channels)

    return dict(w1_hwio=w1_hwio, w2_hwio=w2_hwio, s1=s1, b1=b1, s2=s2, b2=b2)


if __name__ == "__main__":
    N, Cin, H, W = 2, 4, 16, 16       # PyTorch x shape: [2, 4, 16, 16] (NCHW)
    Cout = 8                           # W * Cout = 128 -> lane-dense output

    key = jax.random.PRNGKey(0)
    kx, kp = jax.random.split(key)

    x_nchw = jax.random.normal(kx, (N, Cin, H, W), jnp.float32)
    x_nhwc = jnp.transpose(x_nchw, (0, 2, 3, 1))   # NCHW -> NHWC

    p = make_params(kp, Cin, Cout)

    # kernel-friendly packed weights (BN scale folded, bf16) / BN biases
    w1p = pack_conv_banded(p["w1_hwio"], W, scale=p["s1"])   # (3*W*Cin,  W*Cout)
    w2p = pack_conv_banded(p["w2_hwio"], W, scale=p["s2"])   # (3*W*Cout, W*Cout)
    b1t = tile_bn_bias(p["b1"], W)
    b2t = tile_bn_bias(p["b2"], W)

    out = convblock(x_nhwc, w1p, b1t, w2p, b2t)
    out = jax.block_until_ready(out)

    ref = ref_forward(x_nhwc, p["w1_hwio"], p["s1"], p["b1"],
                      p["w2_hwio"], p["s2"], p["b2"])
    ref = jax.block_until_ready(ref)

    assert out.shape == (N, H, W, Cout)
    max_err = float(jnp.max(jnp.abs(out - ref)))
    # Tolerance covers bf16 matmul operands (f32 accumulation) vs the f32
    # HIGHEST-precision reference.
    assert np.allclose(np.asarray(out), np.asarray(ref),
                       rtol=3e-2, atol=3e-2), f"max abs err {max_err}"

    print("KERNEL_OK")
</pallas_src>

<mosaic_0001>
module attributes {stable_mosaic.version = 11 : i64} {
  func.func @convblock_kernel(%arg0: i32, %arg1: memref<32x64xf32, #tpu.memory_space<vmem>>, %arg2: memref<192x128xbf16, #tpu.memory_space<vmem>>, %arg3: memref<1x128xf32, #tpu.memory_space<vmem>>, %arg4: memref<384x128xbf16, #tpu.memory_space<vmem>>, %arg5: memref<1x128xf32, #tpu.memory_space<vmem>>, %arg6: memref<32x128xf32, #tpu.memory_space<vmem>>) attributes {dimension_semantics = [#tpu.dimension_semantics<parallel>], iteration_bounds = array<i64: 1>, scalar_prefetch = 0 : i64, scratch_operands = 0 : i64, tpu.core_type = #tpu.core_type<tc>, window_params = [{transform_indices = @transform_0, window_bounds = array<i64: 32, 64>}, {pipeline_mode = #tpu.pipeline_mode<synchronous>, transform_indices = @transform_1, window_bounds = array<i64: 192, 128>}, {pipeline_mode = #tpu.pipeline_mode<synchronous>, transform_indices = @transform_2, window_bounds = array<i64: 1, 128>}, {pipeline_mode = #tpu.pipeline_mode<synchronous>, transform_indices = @transform_3, window_bounds = array<i64: 384, 128>}, {pipeline_mode = #tpu.pipeline_mode<synchronous>, transform_indices = @transform_4, window_bounds = array<i64: 1, 128>}, {transform_indices = @transform_5, window_bounds = array<i64: 32, 128>}]} {
    %c0 = arith.constant 0 : index
    %c0_0 = arith.constant 0 : index
    %0 = vector.load %arg1[%c0, %c0_0] : memref<32x64xf32, #tpu.memory_space<vmem>>, vector<32x64xf32>
    %1 = tpu.iota {dimensions = array<i32: 0>} : vector<32x64xi32>
    %cst = arith.constant 0.000000e+00 : f32
    %2 = vector.broadcast %cst : f32 to vector<1x64xf32>
    %3 = vector.extract_strided_slice %0 {offsets = [0, 0], sizes = [31, 64], strides = [1, 1]} : vector<32x64xf32> to vector<31x64xf32>
    %4 = tpu.concatenate %2, %3 in 0 : vector<1x64xf32>, vector<31x64xf32> -> vector<32x64xf32>
    %5 = vector.extract_strided_slice %0 {offsets = [1, 0], sizes = [31, 64], strides = [1, 1]} : vector<32x64xf32> to vector<31x64xf32>
    %6 = tpu.concatenate %5, %2 in 0 : vector<31x64xf32>, vector<1x64xf32> -> vector<32x64xf32>
    %c16_i32 = arith.constant 16 : i32
    %c0_i32 = arith.constant 0 : i32
    %7 = arith.cmpi eq, %c16_i32, %c0_i32 : i32
    %c1_i32 = arith.constant 1 : i32
    %8 = arith.select %7, %c1_i32, %c16_i32 : i32
    %9 = vector.broadcast %8 : i32 to vector<32x64xi32>
    %10 = arith.remsi %1, %9 : vector<32x64xi32>
    %c0_i32_1 = arith.constant 0 : i32
    %11 = vector.broadcast %c0_i32_1 : i32 to vector<32x64xi32>
    %12 = arith.cmpi ne, %10, %11 : vector<32x64xi32>
    %c0_i32_2 = arith.constant 0 : i32
    %13 = vector.broadcast %c0_i32_2 : i32 to vector<32x64xi32>
    %14 = arith.cmpi slt, %10, %13 : vector<32x64xi32>
    %c0_i32_3 = arith.constant 0 : i32
    %15 = arith.cmpi slt, %8, %c0_i32_3 : i32
    %16 = vector.broadcast %15 : i1 to vector<32x64xi1>
    %17 = vector.broadcast %16 : vector<32x64xi1> to vector<32x64xi1>
    %18 = arith.xori %14, %17 : vector<32x64xi1>
    %19 = arith.andi %18, %12 : vector<32x64xi1>
    %20 = vector.broadcast %8 : i32 to vector<32x64xi32>
    %21 = arith.addi %10, %20 : vector<32x64xi32>
    %22 = arith.select %19, %21, %10 : vector<32x64xi1>, vector<32x64xi32>
    %c0_i32_4 = arith.constant 0 : i32
    %23 = vector.broadcast %c0_i32_4 : i32 to vector<32x64xi32>
    %24 = arith.cmpi eq, %22, %23 : vector<32x64xi32>
    %cst_5 = arith.constant 0.000000e+00 : f32
    %25 = vector.broadcast %cst_5 : f32 to vector<32x64xf32>
    %26 = arith.select %24, %25, %4 : vector<32x64xi1>, vector<32x64xf32>
    %c16_i32_6 = arith.constant 16 : i32
    %c0_i32_7 = arith.constant 0 : i32
    %27 = arith.cmpi eq, %c16_i32_6, %c0_i32_7 : i32
    %c1_i32_8 = arith.constant 1 : i32
    %28 = arith.select %27, %c1_i32_8, %c16_i32_6 : i32
    %29 = vector.broadcast %28 : i32 to vector<32x64xi32>
    %30 = arith.remsi %1, %29 : vector<32x64xi32>
    %c0_i32_9 = arith.constant 0 : i32
    %31 = vector.broadcast %c0_i32_9 : i32 to vector<32x64xi32>
    %32 = arith.cmpi ne, %30, %31 : vector<32x64xi32>
    %c0_i32_10 = arith.constant 0 : i32
    %33 = vector.broadcast %c0_i32_10 : i32 to vector<32x64xi32>
    %34 = arith.cmpi slt, %30, %33 : vector<32x64xi32>
    %c0_i32_11 = arith.constant 0 : i32
    %35 = arith.cmpi slt, %28, %c0_i32_11 : i32
    %36 = vector.broadcast %35 : i1 to vector<32x64xi1>
    %37 = vector.broadcast %36 : vector<32x64xi1> to vector<32x64xi1>
    %38 = arith.xori %34, %37 : vector<32x64xi1>
    %39 = arith.andi %38, %32 : vector<32x64xi1>
    %40 = vector.broadcast %28 : i32 to vector<32x64xi32>
    %41 = arith.addi %30, %40 : vector<32x64xi32>
    %42 = arith.select %39, %41, %30 : vector<32x64xi1>, vector<32x64xi32>
    %c15_i32 = arith.constant 15 : i32
    %43 = vector.broadcast %c15_i32 : i32 to vector<32x64xi32>
    %44 = arith.cmpi eq, %42, %43 : vector<32x64xi32>
    %cst_12 = arith.constant 0.000000e+00 : f32
    %45 = vector.broadcast %cst_12 : f32 to vector<32x64xf32>
    %46 = arith.select %44, %45, %6 : vector<32x64xi1>, vector<32x64xf32>
    %47 = tpu.concatenate %26, %0, %46 in 1 : vector<32x64xf32>, vector<32x64xf32>, vector<32x64xf32> -> vector<32x192xf32>
    %48 = arith.truncf %47 : vector<32x192xf32> to vector<32x192xbf16>
    %c0_13 = arith.constant 0 : index
    %c0_14 = arith.constant 0 : index
    %49 = vector.load %arg2[%c0_13, %c0_14] : memref<192x128xbf16, #tpu.memory_space<vmem>>, vector<192x128xbf16>
    %cst_15 = arith.constant dense<0.000000e+00> : vector<32x128xf32>
    %50 = tpu.matmul %48, %49, %cst_15 {dimension_numbers = #tpu.dot_dimension_numbers<[1], [0], [0], [1], [0, 0, 1, 1], [], []>} : vector<32x192xbf16>, vector<192x128xbf16>, vector<32x128xf32> -> vector<32x128xf32>
    %c0_16 = arith.constant 0 : index
    %c0_17 = arith.constant 0 : index
    %51 = vector.load %arg3[%c0_16, %c0_17] : memref<1x128xf32, #tpu.memory_space<vmem>>, vector<1x128xf32>
    %52 = vector.broadcast %51 : vector<1x128xf32> to vector<32x128xf32>
    %53 = arith.addf %50, %52 : vector<32x128xf32>
    %cst_18 = arith.constant 0.000000e+00 : f32
    %54 = vector.broadcast %cst_18 : f32 to vector<32x128xf32>
    %55 = arith.maximumf %53, %54 : vector<32x128xf32>
    %56 = tpu.iota {dimensions = array<i32: 0>} : vector<32x128xi32>
    %cst_19 = arith.constant 0.000000e+00 : f32
    %57 = vector.broadcast %cst_19 : f32 to vector<1x128xf32>
    %58 = vector.extract_strided_slice %55 {offsets = [0, 0], sizes = [31, 128], strides = [1, 1]} : vector<32x128xf32> to vector<31x128xf32>
    %59 = tpu.concatenate %57, %58 in 0 : vector<1x128xf32>, vector<31x128xf32> -> vector<32x128xf32>
    %60 = vector.extract_strided_slice %55 {offsets = [1, 0], sizes = [31, 128], strides = [1, 1]} : vector<32x128xf32> to vector<31x128xf32>
    %61 = tpu.concatenate %60, %57 in 0 : vector<31x128xf32>, vector<1x128xf32> -> vector<32x128xf32>
    %c16_i32_20 = arith.constant 16 : i32
    %c0_i32_21 = arith.constant 0 : i32
    %62 = arith.cmpi eq, %c16_i32_20, %c0_i32_21 : i32
    %c1_i32_22 = arith.constant 1 : i32
    %63 = arith.select %62, %c1_i32_22, %c16_i32_20 : i32
    %64 = vector.broadcast %63 : i32 to vector<32x128xi32>
    %65 = arith.remsi %56, %64 : vector<32x128xi32>
    %c0_i32_23 = arith.constant 0 : i32
    %66 = vector.broadcast %c0_i32_23 : i32 to vector<32x128xi32>
    %67 = arith.cmpi ne, %65, %66 : vector<32x128xi32>
    %c0_i32_24 = arith.constant 0 : i32
    %68 = vector.broadcast %c0_i32_24 : i32 to vector<32x128xi32>
    %69 = arith.cmpi slt, %65, %68 : vector<32x128xi32>
    %c0_i32_25 = arith.constant 0 : i32
    %70 = arith.cmpi slt, %63, %c0_i32_25 : i32
    %71 = vector.broadcast %70 : i1 to vector<32x128xi1>
    %72 = vector.broadcast %71 : vector<32x128xi1> to vector<32x128xi1>
    %73 = arith.xori %69, %72 : vector<32x128xi1>
    %74 = arith.andi %73, %67 : vector<32x128xi1>
    %75 = vector.broadcast %63 : i32 to vector<32x128xi32>
    %76 = arith.addi %65, %75 : vector<32x128xi32>
    %77 = arith.select %74, %76, %65 : vector<32x128xi1>, vector<32x128xi32>
    %c0_i32_26 = arith.constant 0 : i32
    %78 = vector.broadcast %c0_i32_26 : i32 to vector<32x128xi32>
    %79 = arith.cmpi eq, %77, %78 : vector<32x128xi32>
    %cst_27 = arith.constant 0.000000e+00 : f32
    %80 = vector.broadcast %cst_27 : f32 to vector<32x128xf32>
    %81 = arith.select %79, %80, %59 : vector<32x128xi1>, vector<32x128xf32>
    %c16_i32_28 = arith.constant 16 : i32
    %c0_i32_29 = arith.constant 0 : i32
    %82 = arith.cmpi eq, %c16_i32_28, %c0_i32_29 : i32
    %c1_i32_30 = arith.constant 1 : i32
    %83 = arith.select %82, %c1_i32_30, %c16_i32_28 : i32
    %84 = vector.broadcast %83 : i32 to vector<32x128xi32>
    %85 = arith.remsi %56, %84 : vector<32x128xi32>
    %c0_i32_31 = arith.constant 0 : i32
    %86 = vector.broadcast %c0_i32_31 : i32 to vector<32x128xi32>
    %87 = arith.cmpi ne, %85, %86 : vector<32x128xi32>
    %c0_i32_32 = arith.constant 0 : i32
    %88 = vector.broadcast %c0_i32_32 : i32 to vector<32x128xi32>
    %89 = arith.cmpi slt, %85, %88 : vector<32x128xi32>
    %c0_i32_33 = arith.constant 0 : i32
    %90 = arith.cmpi slt, %83, %c0_i32_33 : i32
    %91 = vector.broadcast %90 : i1 to vector<32x128xi1>
    %92 = vector.broadcast %91 : vector<32x128xi1> to vector<32x128xi1>
    %93 = arith.xori %89, %92 : vector<32x128xi1>
    %94 = arith.andi %93, %87 : vector<32x128xi1>
    %95 = vector.broadcast %83 : i32 to vector<32x128xi32>
    %96 = arith.addi %85, %95 : vector<32x128xi32>
    %97 = arith.select %94, %96, %85 : vector<32x128xi1>, vector<32x128xi32>
    %c15_i32_34 = arith.constant 15 : i32
    %98 = vector.broadcast %c15_i32_34 : i32 to vector<32x128xi32>
    %99 = arith.cmpi eq, %97, %98 : vector<32x128xi32>
    %cst_35 = arith.constant 0.000000e+00 : f32
    %100 = vector.broadcast %cst_35 : f32 to vector<32x128xf32>
    %101 = arith.select %99, %100, %61 : vector<32x128xi1>, vector<32x128xf32>
    %102 = tpu.concatenate %81, %55, %101 in 1 : vector<32x128xf32>, vector<32x128xf32>, vector<32x128xf32> -> vector<32x384xf32>
    %103 = arith.truncf %102 : vector<32x384xf32> to vector<32x384xbf16>
    %c0_36 = arith.constant 0 : index
    %c0_37 = arith.constant 0 : index
    %104 = vector.load %arg4[%c0_36, %c0_37] : memref<384x128xbf16, #tpu.memory_space<vmem>>, vector<384x128xbf16>
    %cst_38 = arith.constant dense<0.000000e+00> : vector<32x128xf32>
    %105 = tpu.matmul %103, %104, %cst_38 {dimension_numbers = #tpu.dot_dimension_numbers<[1], [0], [0], [1], [0, 0, 1, 1], [], []>} : vector<32x384xbf16>, vector<384x128xbf16>, vector<32x128xf32> -> vector<32x128xf32>
    %c0_39 = arith.constant 0 : index
    %c0_40 = arith.constant 0 : index
    %106 = vector.load %arg5[%c0_39, %c0_40] : memref<1x128xf32, #tpu.memory_space<vmem>>, vector<1x128xf32>
    %107 = vector.broadcast %106 : vector<1x128xf32> to vector<32x128xf32>
    %108 = arith.addf %105, %107 : vector<32x128xf32>
    %cst_41 = arith.constant 0.000000e+00 : f32
    %109 = vector.broadcast %cst_41 : f32 to vector<32x128xf32>
    %110 = arith.maximumf %108, %109 : vector<32x128xf32>
    %c0_42 = arith.constant 0 : index
    %c0_43 = arith.constant 0 : index
    %111 = vector.load %arg6[%c0_42, %c0_43] : memref<32x128xf32, #tpu.memory_space<vmem>>, vector<32x128xf32>
    tpu.vector_store %arg6[%c0_42, %c0_43], %110 {strides = array<i32>} : memref<32x128xf32, #tpu.memory_space<vmem>>, vector<32x128xf32>,
    return
  }
  func.func @transform_0(%arg0: i32) -> (i32, i32) {
    %c0_i32 = arith.constant 0 : i32
    %c0_i32_0 = arith.constant 0 : i32
    return %arg0, %c0_i32 : i32, i32
  }
  func.func @transform_1(%arg0: i32) -> (i32, i32) {
    %c0_i32 = arith.constant 0 : i32
    %c0_i32_0 = arith.constant 0 : i32
    %c0_i32_1 = arith.constant 0 : i32
    return %c0_i32, %c0_i32_0 : i32, i32
  }
  func.func @transform_2(%arg0: i32) -> (i32, i32) {
    %c0_i32 = arith.constant 0 : i32
    %c0_i32_0 = arith.constant 0 : i32
    %c0_i32_1 = arith.constant 0 : i32
    return %c0_i32, %c0_i32_0 : i32, i32
  }
  func.func @transform_3(%arg0: i32) -> (i32, i32) {
    %c0_i32 = arith.constant 0 : i32
    %c0_i32_0 = arith.constant 0 : i32
    %c0_i32_1 = arith.constant 0 : i32
    return %c0_i32, %c0_i32_0 : i32, i32
  }
  func.func @transform_4(%arg0: i32) -> (i32, i32) {
    %c0_i32 = arith.constant 0 : i32
    %c0_i32_0 = arith.constant 0 : i32
    %c0_i32_1 = arith.constant 0 : i32
    return %c0_i32, %c0_i32_0 : i32, i32
  }
  func.func @transform_5(%arg0: i32) -> (i32, i32) {
    %c0_i32 = arith.constant 0 : i32
    %c0_i32_0 = arith.constant 0 : i32
    return %arg0, %c0_i32 : i32, i32
  }
}

</mosaic_0001>

<llo_original>
// kernel: convblock.1
$region0: #{convblock.1}
  #allocation0 [shape = 'u32[]', space=smem, size = 0x4, offset = 0x4, fixed_abs, tag = 'smem constant byte address 0x4 - core index']
  #allocation1 [shape = 'u32[72,128]{1,0:T(1,128)}', space=vmem, size = 0x9000, scoped, tag = 'internal scratch']
  %s0 = inlined_call_operand.vmem [shape: f32[32,64], index: 0, kind: input, shape index: {}]
  %s1 = inlined_call_operand.vmem [shape: bf16[192,128], index: 1, kind: input, shape index: {}]
  %s2 = inlined_call_operand.vmem [shape: f32[1,128], index: 2, kind: input, shape index: {}]
  %s3 = inlined_call_operand.vmem [shape: bf16[384,128], index: 3, kind: input, shape index: {}]
  %s4 = inlined_call_operand.vmem [shape: f32[1,128], index: 4, kind: input, shape index: {}]
  %s5 = inlined_call_operand.vmem [shape: f32[32,128], index: 5, kind: output, shape index: {}]
  %s6 = sld [smem:[#allocation0]]
  $region30: #{convblock.1} parent=0
    _
  %s8 = ssub.s32 1, %s6
  %s9 = scalar_select 0, %s8, %s6
  // Predicated region
  $region2: #{convblock.1} parent=0 // pred_check
    _
  $region3: #{convblock.1} parent=0 // pred_check_branch
    %11 = sbr.rel (0) target = $region5
  $region4: #{convblock.1} parent=0 // pred_region
    _
  $region5: #{convblock.1} parent=0 // pred_fallthru
    _
  // Predicated region
  $region6: #{convblock.1} parent=0 // pred_check
    _
  $region7: #{convblock.1} parent=0 // pred_check_branch
    %13 = sbr.rel (0) target = $region9
  $region8: #{convblock.1} parent=0 // pred_region
    _
  $region9: #{convblock.1} parent=0 // pred_fallthru
    _
  // Predicated region
  $region10: #{convblock.1} parent=0 // pred_check
    _
  $region11: #{convblock.1} parent=0 // pred_check_branch
    %15 = sbr.rel (0) target = $region13
  $region12: #{convblock.1} parent=0 // pred_region
    _
  $region13: #{convblock.1} parent=0 // pred_fallthru
    _
  // Predicated region
  $region14: #{convblock.1} parent=0 // pred_check
    _
  $region15: #{convblock.1} parent=0 // pred_check_branch
    %17 = sbr.rel (0) target = $region17
  $region16: #{convblock.1} parent=0 // pred_region
    _
  $region17: #{convblock.1} parent=0 // pred_fallthru
    _
  // Predicated region
  $region18: #{convblock.1} parent=0 // pred_check
    _
  $region19: #{convblock.1} parent=0 // pred_check_branch
    %19 = sbr.rel (0) target = $region21
  $region20: #{convblock.1} parent=0 // pred_region
    _
  $region21: #{convblock.1} parent=0 // pred_fallthru
    _
  %v21 = vld [vmem:[%s0] sm:$0xff]
  %v22 = vld [vmem:[%s0 + $0x8] sm:$0xff]
  %v23 = vld [vmem:[%s0 + $0x10] sm:$0xff]
  %v24 = vld [vmem:[%s0 + $0x18] sm:$0xff]
  %v25 = vlaneseq
  %v26 = vshrl.u32 %v25, 7
  %v27 = vadd.s32 %v26, 8
  %v28 = vadd.s32 %v26, 16
  %v29 = vadd.s32 %v26, 24
  %vm34 = vcmask 1040384
  %v35 = vrot.slane %v21, 7
  %v36 = vrot.slane %v22, 7
  %v37 = vsel %vm34, %v35, %v36
  %v38 = vrot.slane %v23, 7
  %v39 = vsel %vm34, %v36, %v38
  %v40 = vrot.slane %v24, 7
  %v41 = vsel %vm34, %v38, %v40
  %v46 = vsel %vm34, 0.0, %v35
  %vm47 = vcmask 1046528
  %v48 = vrot.slane %v21, 1
  %v49 = vrot.slane %v22, 1
  %v50 = vsel %vm47, %v48, %v49
  %v51 = vrot.slane %v23, 1
  %v52 = vsel %vm47, %v49, %v51
  %v53 = vrot.slane %v24, 1
  %v54 = vsel %vm47, %v51, %v53
  %v59 = vsel %vm47, %v53, 0.0
  %vm60 = vcmp.lt.s32.totalorder %v26, 0
  %v61 = vsub.s32 0, %v26
  %v62 = vsel %vm60, %v61, %v26
  %v63 = vshrl.u32 %v62, 4
  %v64 = vand.u32 %v62, 15
  %v65 = vsub.s32 0, %v64
  %v66 = vsel %vm60, %v65, %v64
  %vm67 = vcmp.lt.s32.totalorder %v27, 0
  %v68 = vsub.s32 0, %v27
  %v69 = vsel %vm67, %v68, %v27
  %v70 = vshrl.u32 %v69, 4
  %v71 = vand.u32 %v69, 15
  %v72 = vsub.s32 0, %v71
  %v73 = vsel %vm67, %v72, %v71
  %vm74 = vcmp.lt.s32.totalorder %v28, 0
  %v75 = vsub.s32 0, %v28
  %v76 = vsel %vm74, %v75, %v28
  %v77 = vshrl.u32 %v76, 4
  %v78 = vand.u32 %v76, 15
  %v79 = vsub.s32 0, %v78
  %v80 = vsel %vm74, %v79, %v78
  %vm81 = vcmp.lt.s32.totalorder %v29, 0
  %v82 = vsub.s32 0, %v29
  %v83 = vsel %vm81, %v82, %v29
  %v84 = vshrl.u32 %v83, 4
  %v85 = vand.u32 %v83, 15
  %v86 = vsub.s32 0, %v85
  %v87 = vsel %vm81, %v86, %v85
  %vm88 = vcmp.ne.s32.totalorder %v66, 0
  %vm89 = vcmp.ne.s32.totalorder %v73, 0
  %vm90 = vcmp.ne.s32.totalorder %v80, 0
  %vm91 = vcmp.ne.s32.totalorder %v87, 0
  %vm92 = vcmp.lt.s32.totalorder %v66, 0
  %vm93 = vcmp.lt.s32.totalorder %v73, 0
  %vm94 = vcmp.lt.s32.totalorder %v80, 0
  %vm95 = vcmp.lt.s32.totalorder %v87, 0
  %vm96 = vmand %vm92, %vm88
  %vm97 = vmand %vm93, %vm89
  %vm98 = vmand %vm94, %vm90
  %vm99 = vmand %vm95, %vm91
  %v100 = vadd.s32 %v66, 16
  %v101 = vadd.s32 %v73, 16
  %v102 = vadd.s32 %v80, 16
  %v103 = vadd.s32 %v87, 16
  %v104 = vsel %vm96, %v100, %v66
  %v105 = vsel %vm97, %v101, %v73
  %v106 = vsel %vm98, %v102, %v80
  %v107 = vsel %vm99, %v103, %v87
  %vm108 = vcmp.eq.s32.totalorder %v104, 0
  %vm109 = vcmp.eq.s32.totalorder %v105, 0
  %vm110 = vcmp.eq.s32.totalorder %v106, 0
  %vm111 = vcmp.eq.s32.totalorder %v107, 0
  %v112 = vsel %vm108, 0.0, %v46
  %v113 = vsel %vm109, 0.0, %v37
  %v114 = vsel %vm110, 0.0, %v39
  %v115 = vsel %vm111, 0.0, %v41
  %vm116 = vcmp.eq.s32.totalorder %v104, 15
  %vm117 = vcmp.eq.s32.totalorder %v105, 15
  %vm118 = vcmp.eq.s32.totalorder %v106, 15
  %vm119 = vcmp.eq.s32.totalorder %v107, 15
  %v120 = vsel %vm116, 0.0, %v50
  %v121 = vsel %vm117, 0.0, %v52
  %v122 = vsel %vm118, 0.0, %v54
  %v123 = vsel %vm119, 0.0, %v59
  %124 = vrot.lane.b32.xlu0 %v21, 64
  %v125 = vpop.permute.xlu0 %124
  %126 = vrot.lane.b32.xlu0 %v22, 64
  %v127 = vpop.permute.xlu0 %126
  %128 = vrot.lane.b32.xlu0 %v23, 64
  %v129 = vpop.permute.xlu0 %128
  %130 = vrot.lane.b32.xlu0 %v24, 64
  %v131 = vpop.permute.xlu0 %130
  %vm136 = vcmask 523264
  %v137 = vsel %vm136, %v112, %v125
  %v138 = vsel %vm136, %v113, %v127
  %v139 = vsel %vm136, %v114, %v129
  %v140 = vsel %vm136, %v115, %v131
  %v141 = vpack.c.bf16 %v138, %v137
  %v142 = vpack.c.bf16 %v121, %v120
  %v143 = vpack.c.bf16 %v140, %v139
  %v144 = vpack.c.bf16 %v123, %v122
  %v145 = vld [vmem:[%s1] sm:$0xf]
  %v146 = vld [vmem:[%s1 + $0x4] sm:$0xf]
  %v147 = vld [vmem:[%s1 + $0x8] sm:$0xf]
  %v148 = vld [vmem:[%s1 + $0xc] sm:$0xf]
  %v149 = vld [vmem:[%s1 + $0x10] sm:$0xf]
  %v150 = vld [vmem:[%s1 + $0x14] sm:$0xf]
  %v151 = vld [vmem:[%s1 + $0x18] sm:$0xf]
  %v152 = vld [vmem:[%s1 + $0x1c] sm:$0xf]
  %v153 = vld [vmem:[%s1 + $0x20] sm:$0xf]
  %v154 = vld [vmem:[%s1 + $0x24] sm:$0xf]
  %v155 = vld [vmem:[%s1 + $0x28] sm:$0xf]
  %v156 = vld [vmem:[%s1 + $0x2c] sm:$0xf]
  %v157 = vld [vmem:[%s1 + $0x30] sm:$0xf]
  %v158 = vld [vmem:[%s1 + $0x34] sm:$0xf]
  %v159 = vld [vmem:[%s1 + $0x38] sm:$0xf]
  %v160 = vld [vmem:[%s1 + $0x3c] sm:$0xf]
  %v161 = vld [vmem:[%s1 + $0x40] sm:$0xf]
  %v162 = vld [vmem:[%s1 + $0x44] sm:$0xf]
  %v163 = vld [vmem:[%s1 + $0x48] sm:$0xf]
  %v164 = vld [vmem:[%s1 + $0x4c] sm:$0xf]
  %v165 = vld [vmem:[%s1 + $0x50] sm:$0xf]
  %v166 = vld [vmem:[%s1 + $0x54] sm:$0xf]
  %v167 = vld [vmem:[%s1 + $0x58] sm:$0xf]
  %v168 = vld [vmem:[%s1 + $0x5c] sm:$0xf]
  %v169 = vld [vmem:[%s2] sm:$0x1]
  %v171 = vperm.slane %v169, 0
  %v197 = vunpack.c.l.b16 %v145
  %v198 = vunpack.c.l.b16 %v146
  %v199 = vunpack.c.l.b16 %v147
  %v200 = vunpack.c.l.b16 %v148
  %v201 = vunpack.c.l.b16 %v149
  %v202 = vunpack.c.l.b16 %v150
  %v203 = vunpack.c.l.b16 %v151
  %v204 = vunpack.c.l.b16 %v152
  %v205 = vunpack.c.l.b16 %v153
  %v206 = vunpack.c.l.b16 %v154
  %v207 = vunpack.c.l.b16 %v155
  %v208 = vunpack.c.l.b16 %v156
  %v209 = vunpack.c.l.b16 %v157
  %v210 = vunpack.c.l.b16 %v158
  %v211 = vunpack.c.l.b16 %v159
  %v212 = vunpack.c.l.b16 %v160
  %v213 = vunpack.c.l.b16 %v161
  %v214 = vunpack.c.l.b16 %v162
  %v215 = vunpack.c.l.b16 %v163
  %v216 = vunpack.c.l.b16 %v164
  %v217 = vunpack.c.l.b16 %v165
  %v218 = vunpack.c.l.b16 %v166
  %v219 = vunpack.c.l.b16 %v167
  %v220 = vunpack.c.l.b16 %v168
  %v221 = vpack.c.b16 %v198, %v197
  %v222 = vpack.c.b16 %v200, %v199
  %v223 = vpack.c.b16 %v202, %v201
  %v224 = vpack.c.b16 %v204, %v203
  %v225 = vpack.c.b16 %v206, %v205
  %v226 = vpack.c.b16 %v208, %v207
  %v227 = vpack.c.b16 %v210, %v209
  %v228 = vpack.c.b16 %v212, %v211
  %v229 = vpack.c.b16 %v214, %v213
  %v230 = vpack.c.b16 %v216, %v215
  %v231 = vpack.c.b16 %v218, %v217
  %v232 = vpack.c.b16 %v220, %v219
  %v246 = vsel %vm136, %v142, 0
  %v249 = vsel %vm136, %v144, 0
  %251 = vmatpush.bf16.msra.mxu0 %v228
  %252 = vmatpush.bf16.msra.mxu0 %v227
  %253 = vmatpush.bf16.msra.mxu0 %v226
  %254 = vmatpush.bf16.msra.mxu0 %v225
  %255 = vmatpush.bf16.msra.mxu0 %v224
  %256 = vmatpush.bf16.msra.mxu0 %v223
  %257 = vmatpush.bf16.msra.mxu0 %v222
  %258 = vmatpush.bf16.msra.mxu0 %v221
  %259 = vmatmul.bf16.gmra.mxu0 %v141
  %v260 = vpop.f32.mrf.mxu0
  %v261 = vadd.f32 %v171, %v260
  %v262 = vpop.f32.mrf.mxu0
  %v263 = vadd.f32 %v171, %v262
  %264 = vmatmul.bf16.gmra.mxu0 %v143
  %v265 = vpop.f32.mrf.mxu0
  %v266 = vadd.f32 %v171, %v265
  %v267 = vpop.f32.mrf.mxu0
  %v268 = vadd.f32 %v171, %v267
  %269 = vdwg.mxu0
  %270 = vmatpush.bf16.msra.mxu0 0
  %271 = vmatpush.bf16.msra.mxu0 0
  %272 = vmatpush.bf16.msra.mxu0 0
  %273 = vmatpush.bf16.msra.mxu0 0
  %274 = vmatpush.bf16.msra.mxu0 %v232
  %275 = vmatpush.bf16.msra.mxu0 %v231
  %276 = vmatpush.bf16.msra.mxu0 %v230
  %277 = vmatpush.bf16.msra.mxu0 %v229
  %278 = vmatmul.bf16.gmra.mxu0 %v246
  %v279 = vpop.f32.mrf.mxu0
  %v280 = vadd.f32 %v261, %v279
  %v281 = vpop.f32.mrf.mxu0
  %v282 = vadd.f32 %v263, %v281
  %283 = vmatmul.bf16.gmra.mxu0 %v249
  %v284 = vpop.f32.mrf.mxu0
  %v285 = vadd.f32 %v266, %v284
  %v286 = vpop.f32.mrf.mxu0
  %v287 = vadd.f32 %v268, %v286
  %288 = vdwg.mxu0
  %v289 = vmax.f32 %v280, 0.0
  %v290 = vmax.f32 %v282, 0.0
  %v291 = vmax.f32 %v285, 0.0
  %v292 = vmax.f32 %v287, 0.0
  %v297 = vrot.slane %v289, 7
  %v298 = vrot.slane %v290, 7
  %v299 = vsel %vm34, %v297, %v298
  %v300 = vrot.slane %v291, 7
  %v301 = vsel %vm34, %v298, %v300
  %v302 = vrot.slane %v292, 7
  %v303 = vsel %vm34, %v300, %v302
  %v308 = vsel %vm34, 0.0, %v297
  %v309 = vrot.slane %v289, 1
  %v310 = vrot.slane %v290, 1
  %v311 = vsel %vm47, %v309, %v310
  %v312 = vrot.slane %v291, 1
  %v313 = vsel %vm47, %v310, %v312
  %v314 = vrot.slane %v292, 1
  %v315 = vsel %vm47, %v312, %v314
  %v320 = vsel %vm47, %v314, 0.0
  %v321 = vsel %vm108, 0.0, %v308
  %v322 = vsel %vm109, 0.0, %v299
  %v323 = vsel %vm110, 0.0, %v301
  %v324 = vsel %vm111, 0.0, %v303
  %v325 = vsel %vm116, 0.0, %v311
  %v326 = vsel %vm117, 0.0, %v313
  %v327 = vsel %vm118, 0.0, %v315
  %v328 = vsel %vm119, 0.0, %v320
  %v329 = vpack.c.bf16 %v322, %v321
  %v330 = vpack.c.bf16 %v290, %v289
  %v331 = vpack.c.bf16 %v326, %v325
  %v332 = vpack.c.bf16 %v324, %v323
  %v333 = vpack.c.bf16 %v292, %v291
  %v334 = vpack.c.bf16 %v328, %v327
  %v335 = vld [vmem:[%s3] sm:$0xf]
  %v336 = vld [vmem:[%s3 + $0x4] sm:$0xf]
  %v337 = vld [vmem:[%s3 + $0x8] sm:$0xf]
  %v338 = vld [vmem:[%s3 + $0xc] sm:$0xf]
  %v339 = vld [vmem:[%s3 + $0x10] sm:$0xf]
  %v340 = vld [vmem:[%s3 + $0x14] sm:$0xf]
  %v341 = vld [vmem:[%s3 + $0x18] sm:$0xf]
  %v342 = vld [vmem:[%s3 + $0x1c] sm:$0xf]
  %v343 = vld [vmem:[%s3 + $0x20] sm:$0xf]
  %v344 = vld [vmem:[%s3 + $0x24] sm:$0xf]
  %v345 = vld [vmem:[%s3 + $0x28] sm:$0xf]
  %v346 = vld [vmem:[%s3 + $0x2c] sm:$0xf]
  %v347 = vld [vmem:[%s3 + $0x30] sm:$0xf]
  %v348 = vld [vmem:[%s3 + $0x34] sm:$0xf]
  %v349 = vld [vmem:[%s3 + $0x38] sm:$0xf]
  %v350 = vld [vmem:[%s3 + $0x3c] sm:$0xf]
  %v351 = vld [vmem:[%s3 + $0x40] sm:$0xf]
  %v352 = vld [vmem:[%s3 + $0x44] sm:$0xf]
  %v353 = vld [vmem:[%s3 + $0x48] sm:$0xf]
  %v354 = vld [vmem:[%s3 + $0x4c] sm:$0xf]
  %v355 = vld [vmem:[%s3 + $0x50] sm:$0xf]
  %v356 = vld [vmem:[%s3 + $0x54] sm:$0xf]
  %v357 = vld [vmem:[%s3 + $0x58] sm:$0xf]
  %v358 = vld [vmem:[%s3 + $0x5c] sm:$0xf]
  %v359 = vld [vmem:[%s3 + $0x60] sm:$0xf]
  %v360 = vld [vmem:[%s3 + $0x64] sm:$0xf]
  %v361 = vld [vmem:[%s3 + $0x68] sm:$0xf]
  %v362 = vld [vmem:[%s3 + $0x6c] sm:$0xf]
  %v363 = vld [vmem:[%s3 + $0x70] sm:$0xf]
  %v364 = vld [vmem:[%s3 + $0x74] sm:$0xf]
  %v365 = vld [vmem:[%s3 + $0x78] sm:$0xf]
  %v366 = vld [vmem:[%s3 + $0x7c] sm:$0xf]
  %v367 = vld [vmem:[%s3 + $0x80] sm:$0xf]
  %v368 = vld [vmem:[%s3 + $0x84] sm:$0xf]
  %v369 = vld [vmem:[%s3 + $0x88] sm:$0xf]
  %v370 = vld [vmem:[%s3 + $0x8c] sm:$0xf]
  %v371 = vld [vmem:[%s3 + $0x90] sm:$0xf]
  %v372 = vld [vmem:[%s3 + $0x94] sm:$0xf]
  %v373 = vld [vmem:[%s3 + $0x98] sm:$0xf]
  %v374 = vld [vmem:[%s3 + $0x9c] sm:$0xf]
  %v375 = vld [vmem:[%s3 + $0xa0] sm:$0xf]
  %v376 = vld [vmem:[%s3 + $0xa4] sm:$0xf]
  %v377 = vld [vmem:[%s3 + $0xa8] sm:$0xf]
  %v378 = vld [vmem:[%s3 + $0xac] sm:$0xf]
  %v379 = vld [vmem:[%s3 + $0xb0] sm:$0xf]
  %v380 = vld [vmem:[%s3 + $0xb4] sm:$0xf]
  %v381 = vld [vmem:[%s3 + $0xb8] sm:$0xf]
  %v382 = vld [vmem:[%s3 + $0xbc] sm:$0xf]
  %v383 = vld [vmem:[%s4] sm:$0x1]
  %v385 = vperm.slane %v383, 0
  %v435 = vunpack.c.l.b16 %v335
  %v436 = vunpack.c.l.b16 %v336
  %v437 = vunpack.c.l.b16 %v337
  %v438 = vunpack.c.l.b16 %v338
  %v439 = vunpack.c.l.b16 %v339
  %v440 = vunpack.c.l.b16 %v340
  %v441 = vunpack.c.l.b16 %v341
  %v442 = vunpack.c.l.b16 %v342
  %v443 = vunpack.c.l.b16 %v343
  %v444 = vunpack.c.l.b16 %v344
  %v445 = vunpack.c.l.b16 %v345
  %v446 = vunpack.c.l.b16 %v346
  %v447 = vunpack.c.l.b16 %v347
  %v448 = vunpack.c.l.b16 %v348
  %v449 = vunpack.c.l.b16 %v349
  %v450 = vunpack.c.l.b16 %v350
  %v451 = vunpack.c.l.b16 %v351
  %v452 = vunpack.c.l.b16 %v352
  %v453 = vunpack.c.l.b16 %v353
  %v454 = vunpack.c.l.b16 %v354
  %v455 = vunpack.c.l.b16 %v355
  %v456 = vunpack.c.l.b16 %v356
  %v457 = vunpack.c.l.b16 %v357
  %v458 = vunpack.c.l.b16 %v358
  %v459 = vunpack.c.l.b16 %v359
  %v460 = vunpack.c.l.b16 %v360
  %v461 = vunpack.c.l.b16 %v361
  %v462 = vunpack.c.l.b16 %v362
  %v463 = vunpack.c.l.b16 %v363
  %v464 = vunpack.c.l.b16 %v364
  %v465 = vunpack.c.l.b16 %v365
  %v466 = vunpack.c.l.b16 %v366
  %v467 = vunpack.c.l.b16 %v367
  %v468 = vunpack.c.l.b16 %v368
  %v469 = vunpack.c.l.b16 %v369
  %v470 = vunpack.c.l.b16 %v370
  %v471 = vunpack.c.l.b16 %v371
  %v472 = vunpack.c.l.b16 %v372
  %v473 = vunpack.c.l.b16 %v373
  %v474 = vunpack.c.l.b16 %v374
  %v475 = vunpack.c.l.b16 %v375
  %v476 = vunpack.c.l.b16 %v376
  %v477 = vunpack.c.l.b16 %v377
  %v478 = vunpack.c.l.b16 %v378
  %v479 = vunpack.c.l.b16 %v379
  %v480 = vunpack.c.l.b16 %v380
  %v481 = vunpack.c.l.b16 %v381
  %v482 = vunpack.c.l.b16 %v382
  %v483 = vpack.c.b16 %v436, %v435
  %v484 = vpack.c.b16 %v438, %v437
  %v485 = vpack.c.b16 %v440, %v439
  %v486 = vpack.c.b16 %v442, %v441
  %v487 = vpack.c.b16 %v444, %v443
  %v488 = vpack.c.b16 %v446, %v445
  %v489 = vpack.c.b16 %v448, %v447
  %v490 = vpack.c.b16 %v450, %v449
  %v491 = vpack.c.b16 %v452, %v451
  %v492 = vpack.c.b16 %v454, %v453
  %v493 = vpack.c.b16 %v456, %v455
  %v494 = vpack.c.b16 %v458, %v457
  %v495 = vpack.c.b16 %v460, %v459
  %v496 = vpack.c.b16 %v462, %v461
  %v497 = vpack.c.b16 %v464, %v463
  %v498 = vpack.c.b16 %v466, %v465
  %v499 = vpack.c.b16 %v468, %v467
  %v500 = vpack.c.b16 %v470, %v469
  %v501 = vpack.c.b16 %v472, %v471
  %v502 = vpack.c.b16 %v474, %v473
  %v503 = vpack.c.b16 %v476, %v475
  %v504 = vpack.c.b16 %v478, %v477
  %v505 = vpack.c.b16 %v480, %v479
  %v506 = vpack.c.b16 %v482, %v481
  %531 = vmatpush.bf16.msra.mxu0 %v490
  %532 = vmatpush.bf16.msra.mxu0 %v489
  %533 = vmatpush.bf16.msra.mxu0 %v488
  %534 = vmatpush.bf16.msra.mxu0 %v487
  %535 = vmatpush.bf16.msra.mxu0 %v486
  %536 = vmatpush.bf16.msra.mxu0 %v485
  %537 = vmatpush.bf16.msra.mxu0 %v484
  %538 = vmatpush.bf16.msra.mxu0 %v483
  %539 = vmatmul.bf16.gmra.mxu0 %v329
  %v540 = vpop.f32.mrf.mxu0
  %v541 = vadd.f32 %v385, %v540
  %v542 = vpop.f32.mrf.mxu0
  %v543 = vadd.f32 %v385, %v542
  %544 = vmatmul.bf16.gmra.mxu0 %v332
  %v545 = vpop.f32.mrf.mxu0
  %v546 = vadd.f32 %v385, %v545
  %v547 = vpop.f32.mrf.mxu0
  %v548 = vadd.f32 %v385, %v547
  %549 = vdwg.mxu0
  %550 = vmatpush.bf16.msra.mxu0 %v498
  %551 = vmatpush.bf16.msra.mxu0 %v497
  %552 = vmatpush.bf16.msra.mxu0 %v496
  %553 = vmatpush.bf16.msra.mxu0 %v495
  %554 = vmatpush.bf16.msra.mxu0 %v494
  %555 = vmatpush.bf16.msra.mxu0 %v493
  %556 = vmatpush.bf16.msra.mxu0 %v492
  %557 = vmatpush.bf16.msra.mxu0 %v491
  %558 = vmatmul.bf16.gmra.mxu0 %v330
  %v559 = vpop.f32.mrf.mxu0
  %v560 = vadd.f32 %v541, %v559
  %v561 = vpop.f32.mrf.mxu0
  %v562 = vadd.f32 %v543, %v561
  %563 = vmatmul.bf16.gmra.mxu0 %v333
  %v564 = vpop.f32.mrf.mxu0
  %v565 = vadd.f32 %v546, %v564
  %v566 = vpop.f32.mrf.mxu0
  %v567 = vadd.f32 %v548, %v566
  %568 = vdwg.mxu0
  %569 = vmatpush.bf16.msra.mxu0 %v506
  %570 = vmatpush.bf16.msra.mxu0 %v505
  %571 = vmatpush.bf16.msra.mxu0 %v504
  %572 = vmatpush.bf16.msra.mxu0 %v503
  %573 = vmatpush.bf16.msra.mxu0 %v502
  %574 = vmatpush.bf16.msra.mxu0 %v501
  %575 = vmatpush.bf16.msra.mxu0 %v500
  %576 = vmatpush.bf16.msra.mxu0 %v499
  %577 = vmatmul.bf16.gmra.mxu0 %v331
  %v578 = vpop.f32.mrf.mxu0
  %v579 = vadd.f32 %v560, %v578
  %v580 = vpop.f32.mrf.mxu0
  %v581 = vadd.f32 %v562, %v580
  %582 = vmatmul.bf16.gmra.mxu0 %v334
  %v583 = vpop.f32.mrf.mxu0
  %v584 = vadd.f32 %v565, %v583
  %v585 = vpop.f32.mrf.mxu0
  %v586 = vadd.f32 %v567, %v585
  %587 = vdwg.mxu0
  %v588 = vmax.f32 %v579, 0.0
  %v589 = vmax.f32 %v581, 0.0
  %v590 = vmax.f32 %v584, 0.0
  %v591 = vmax.f32 %v586, 0.0
  %592 = vst [vmem:[%s5] sm:$0xff] %v588
  %593 = vst [vmem:[%s5 + $0x8] sm:$0xff] %v589
  %594 = vst [vmem:[%s5 + $0x10] sm:$0xff] %v590
  %595 = vst [vmem:[%s5 + $0x18] sm:$0xff] %v591
  // Predicated region
  $region22: #{convblock.1} parent=0 // pred_check
    _
  $region23: #{convblock.1} parent=0 // pred_check_branch
    %597 = sbr.rel (0) target = $region25
  $region24: #{convblock.1} parent=0 // pred_region
    _
  $region25: #{convblock.1} parent=0 // pred_fallthru
    _
  // Predicated region
  $region26: #{convblock.1} parent=0 // pred_check
    _
  $region27: #{convblock.1} parent=0 // pred_check_branch
    %599 = sbr.rel (0) target = $region29
  $region28: #{convblock.1} parent=0 // pred_region
    _
  $region29: #{convblock.1} parent=0 // pred_fallthru
    _

</llo_original>
